<compile_context>
chip_gen: v5e
topology: v5e:2x2
jax: 0.10.0
libtpu: 0.0.40
codegen_flags: <defaults>
</compile_context>

<pallas_src>
import jax
import jax.numpy as jnp
from jax.experimental import pallas as pl
from jax.experimental.pallas import tpu as pltpu

HIDDEN = 64         # logical hidden width of DefaultNN
HIDDEN_PAD = 128    # lane-aligned hidden width used inside the kernel
LANE = 128
SUBLANE = 8
MAX_BLOCK_BATCH = 8192   # keeps double-buffered tiles + intermediates < 32 MiB


def _round_up(x, m):
    return (x + m - 1) // m * m


def _mlp_kernel(x_ref, w1_ref, b1_ref, w2_ref, b2_ref, w3_ref, b3_ref, o_ref):
    # Full f32 path; the MXU accumulates in f32. Weights/biases are VMEM-resident
    # (constant index_map) so only x and the narrow output stream over HBM.
    x = x_ref[...]                                                    # (tb, in) f32
    h = jnp.dot(x, w1_ref[...], preferred_element_type=jnp.float32)   # (tb, 128)
    h = jnp.maximum(h + b1_ref[...], 0.0)
    h = jnp.dot(h, w2_ref[...], preferred_element_type=jnp.float32)   # (tb, 128)
    h = jnp.maximum(h + b2_ref[...], 0.0)
    out = jnp.dot(h, w3_ref[...], preferred_element_type=jnp.float32)  # (tb, out)
    o_ref[...] = out + b3_ref[...]


def prepare_params(params):
    """Pad + lay out the weights ONCE (hoisted out of the per-call forward path).

    Raw params: w1 [in,64], w2 [64,64], w3 [64,out]  (stored [fan_in, fan_out]),
    biases [1, fan_out], all float32.
    """
    w1, b1, w2, b2, w3, b3 = (jnp.asarray(params[k], jnp.float32)
                              for k in ("w1", "b1", "w2", "b2", "w3", "b3"))
    input_dim = w1.shape[0]
    output_dim = w3.shape[1]
    f32 = jnp.float32
    w1p = jnp.zeros((input_dim, HIDDEN_PAD), f32).at[:, :HIDDEN].set(w1)
    b1p = jnp.zeros((1, HIDDEN_PAD), f32).at[:, :HIDDEN].set(b1.reshape(1, -1))
    w2p = jnp.zeros((HIDDEN_PAD, HIDDEN_PAD), f32).at[:HIDDEN, :HIDDEN].set(w2)
    b2p = jnp.zeros((1, HIDDEN_PAD), f32).at[:, :HIDDEN].set(b2.reshape(1, -1))
    w3p = jnp.zeros((HIDDEN_PAD, output_dim), f32).at[:HIDDEN, :].set(w3)
    b3p = b3.reshape(1, output_dim)
    return {"w1p": w1p, "b1p": b1p, "w2p": w2p, "b2p": b2p,
            "w3p": w3p, "b3p": b3p}


def _batch_dim_semantics():
    """CORE_PARALLEL on v7x (2 TensorCores/chip, each with its own HBM port) so
    the batch grid axis is split across both cores; plain "parallel" elsewhere
    (it is effectively a no-op on single-core v5e/v6e)."""
    try:
        kind = jax.devices()[0].device_kind.lower()
    except Exception:
        kind = ""
    if "v7" in kind:
        return (getattr(pltpu, "CORE_PARALLEL", "parallel"),)
    return ("parallel",)


def default_nn_forward(obs, prepared, *, block_batch=2048):
    """obs: [batch, input_dim] float32. prepared: output of prepare_params().
    Returns float32 [batch, output_dim] (same math as the PyTorch module)."""
    w1p, b1p, w2p, b2p, w3p, b3p = (prepared[k] for k in
                                    ("w1p", "b1p", "w2p", "b2p", "w3p", "b3p"))
    obs = jnp.asarray(obs, jnp.float32)
    batch, input_dim = obs.shape
    assert input_dim == w1p.shape[0], "input_dim mismatch with prepared params"
    output_dim = w3p.shape[1]

    # --- Batch tiling: big lane-aligned tiles, bounded by VMEM on every gen.
    block_batch = min(MAX_BLOCK_BATCH, max(LANE, _round_up(block_batch, LANE)))
    batch_pad = _round_up(batch, SUBLANE)          # pad at most 7 rows
    if batch_pad >= LANE:
        tb = min(block_batch, (batch_pad // LANE) * LANE)   # multiple of 128
    else:
        tb = batch_pad                                      # tiny batch: one tile
    num_blocks = pl.cdiv(batch_pad, tb)

    x = obs
    if batch_pad != batch:  # minimal sublane pad only; no full tile-multiple copy
        x = jnp.pad(obs, ((0, batch_pad - batch), (0, 0)))

    flops = 2 * batch_pad * (input_dim * HIDDEN_PAD + HIDDEN_PAD * HIDDEN_PAD
                             + HIDDEN_PAD * output_dim)
    bytes_accessed = 4 * (x.size + w1p.size + b1p.size + w2p.size + b2p.size
                          + w3p.size + b3p.size + batch_pad * output_dim)

    def run(dim_semantics):
        return pl.pallas_call(
            _mlp_kernel,
            out_shape=jax.ShapeDtypeStruct((batch_pad, output_dim), jnp.float32),
            grid=(num_blocks,),
            in_specs=[
                pl.BlockSpec((tb, input_dim), lambda i: (i, 0)),           # x streams
                pl.BlockSpec((input_dim, HIDDEN_PAD), lambda i: (0, 0)),   # weights stay
                pl.BlockSpec((1, HIDDEN_PAD), lambda i: (0, 0)),           #  VMEM-resident
                pl.BlockSpec((HIDDEN_PAD, HIDDEN_PAD), lambda i: (0, 0)),
                pl.BlockSpec((1, HIDDEN_PAD), lambda i: (0, 0)),
                pl.BlockSpec((HIDDEN_PAD, output_dim), lambda i: (0, 0)),
                pl.BlockSpec((1, output_dim), lambda i: (0, 0)),
            ],
            # Output block uses the true output width (full minor dim) -> no
            # write amplification, no post-kernel slice over a padded buffer.
            out_specs=pl.BlockSpec((tb, output_dim), lambda i: (i, 0)),
            compiler_params=pltpu.CompilerParams(
                dimension_semantics=dim_semantics,
                vmem_limit_bytes=32 * 1024 * 1024),
            cost_estimate=pl.CostEstimate(flops=int(flops), transcendentals=0,
                                          bytes_accessed=int(bytes_accessed)),
        )(x, w1p, b1p, w2p, b2p, w3p, b3p)

    dim_sems = _batch_dim_semantics()
    try:
        out_full = run(dim_sems)
    except Exception:
        if dim_sems == ("parallel",):
            raise
        out_full = run(("parallel",))   # safety net if CORE_PARALLEL is rejected

    return out_full if batch_pad == batch else out_full[:batch]


def init_params(key, input_dim, output_dim, hidden=HIDDEN):
    """Deterministic init mimicking nn.Linear's U(-1/sqrt(fan_in), 1/sqrt(fan_in))."""
    ks = jax.random.split(key, 6)

    def lin(kw, kb, fan_in, fan_out):
        bound = 1.0 / jnp.sqrt(fan_in)
        w = jax.random.uniform(kw, (fan_in, fan_out), jnp.float32, -bound, bound)
        b = jax.random.uniform(kb, (1, fan_out), jnp.float32, -bound, bound)
        return w, b

    w1, b1 = lin(ks[0], ks[1], input_dim, hidden)
    w2, b2 = lin(ks[2], ks[3], hidden, hidden)
    w3, b3 = lin(ks[4], ks[5], hidden, output_dim)
    return {"w1": w1, "b1": b1, "w2": w2, "b2": b2, "w3": w3, "b3": b3}


if __name__ == "__main__":
    input_dim, output_dim = 32, 8
    key = jax.random.PRNGKey(0)
    k_obs, k_params = jax.random.split(key)

    params = init_params(k_params, input_dim, output_dim)
    prepared = prepare_params(params)   # hoisted weight prep: runs once

    def reference(o):
        h = jnp.maximum(o @ params["w1"] + params["b1"], 0.0)
        h = jnp.maximum(h @ params["w2"] + params["b2"], 0.0)
        return h @ params["w3"] + params["b3"]

    # (batch, forward kwargs): sublane-aligned, ragged (pad+slice path), and a
    # multi-block grid (streams x/out tiles while weights stay VMEM-resident).
    cases = [(64, {}), (37, {}), (384, dict(block_batch=128))]
    for batch, kwargs in cases:
        obs = jax.random.normal(jax.random.fold_in(k_obs, batch),
                                (batch, input_dim), jnp.float32)
        out = jax.block_until_ready(default_nn_forward(obs, prepared, **kwargs))
        ref = reference(obs)
        assert out.shape == (batch, output_dim)
        assert jnp.allclose(out, ref, atol=5e-3, rtol=5e-3), (
            batch, float(jnp.max(jnp.abs(out - ref))))

    print("KERNEL_OK")
</pallas_src>

<mosaic_0001>
module attributes {stable_mosaic.version = 11 : i64} {
  func.func @_mlp_kernel(%arg0: i32, %arg1: memref<64x32xf32, #tpu.memory_space<vmem>>, %arg2: memref<32x128xf32, #tpu.memory_space<vmem>>, %arg3: memref<1x128xf32, #tpu.memory_space<vmem>>, %arg4: memref<128x128xf32, #tpu.memory_space<vmem>>, %arg5: memref<1x128xf32, #tpu.memory_space<vmem>>, %arg6: memref<128x8xf32, #tpu.memory_space<vmem>>, %arg7: memref<1x8xf32, #tpu.memory_space<vmem>>, %arg8: memref<64x8xf32, #tpu.memory_space<vmem>>) attributes {dimension_semantics = [#tpu.dimension_semantics<parallel>], iteration_bounds = array<i64: 1>, scalar_prefetch = 0 : i64, scratch_operands = 0 : i64, tpu.core_type = #tpu.core_type<tc>, window_params = [{transform_indices = @transform_0, window_bounds = array<i64: 64, 32>}, {pipeline_mode = #tpu.pipeline_mode<synchronous>, transform_indices = @transform_1, window_bounds = array<i64: 32, 128>}, {pipeline_mode = #tpu.pipeline_mode<synchronous>, transform_indices = @transform_2, window_bounds = array<i64: 1, 128>}, {pipeline_mode = #tpu.pipeline_mode<synchronous>, transform_indices = @transform_3, window_bounds = array<i64: 128, 128>}, {pipeline_mode = #tpu.pipeline_mode<synchronous>, transform_indices = @transform_4, window_bounds = array<i64: 1, 128>}, {pipeline_mode = #tpu.pipeline_mode<synchronous>, transform_indices = @transform_5, window_bounds = array<i64: 128, 8>}, {pipeline_mode = #tpu.pipeline_mode<synchronous>, transform_indices = @transform_6, window_bounds = array<i64: 1, 8>}, {transform_indices = @transform_7, window_bounds = array<i64: 64, 8>}]} {
    %c0 = arith.constant 0 : index
    %c0_0 = arith.constant 0 : index
    %0 = vector.load %arg1[%c0, %c0_0] : memref<64x32xf32, #tpu.memory_space<vmem>>, vector<64x32xf32>
    %c0_1 = arith.constant 0 : index
    %c0_2 = arith.constant 0 : index
    %1 = vector.load %arg2[%c0_1, %c0_2] : memref<32x128xf32, #tpu.memory_space<vmem>>, vector<32x128xf32>
    %cst = arith.constant dense<0.000000e+00> : vector<64x128xf32>
    %2 = tpu.matmul %0, %1, %cst {dimension_numbers = #tpu.dot_dimension_numbers<[1], [0], [0], [1], [0, 0, 1, 1], [], []>} : vector<64x32xf32>, vector<32x128xf32>, vector<64x128xf32> -> vector<64x128xf32>
    %c0_3 = arith.constant 0 : index
    %c0_4 = arith.constant 0 : index
    %3 = vector.load %arg3[%c0_3, %c0_4] : memref<1x128xf32, #tpu.memory_space<vmem>>, vector<1x128xf32>
    %4 = vector.broadcast %3 : vector<1x128xf32> to vector<64x128xf32>
    %5 = arith.addf %2, %4 : vector<64x128xf32>
    %cst_5 = arith.constant 0.000000e+00 : f32
    %6 = vector.broadcast %cst_5 : f32 to vector<64x128xf32>
    %7 = arith.maximumf %5, %6 : vector<64x128xf32>
    %c0_6 = arith.constant 0 : index
    %c0_7 = arith.constant 0 : index
    %8 = vector.load %arg4[%c0_6, %c0_7] : memref<128x128xf32, #tpu.memory_space<vmem>>, vector<128x128xf32>
    %cst_8 = arith.constant dense<0.000000e+00> : vector<64x128xf32>
    %9 = tpu.matmul %7, %8, %cst_8 {dimension_numbers = #tpu.dot_dimension_numbers<[1], [0], [0], [1], [0, 0, 1, 1], [], []>} : vector<64x128xf32>, vector<128x128xf32>, vector<64x128xf32> -> vector<64x128xf32>
    %c0_9 = arith.constant 0 : index
    %c0_10 = arith.constant 0 : index
    %10 = vector.load %arg5[%c0_9, %c0_10] : memref<1x128xf32, #tpu.memory_space<vmem>>, vector<1x128xf32>
    %11 = vector.broadcast %10 : vector<1x128xf32> to vector<64x128xf32>
    %12 = arith.addf %9, %11 : vector<64x128xf32>
    %cst_11 = arith.constant 0.000000e+00 : f32
    %13 = vector.broadcast %cst_11 : f32 to vector<64x128xf32>
    %14 = arith.maximumf %12, %13 : vector<64x128xf32>
    %c0_12 = arith.constant 0 : index
    %c0_13 = arith.constant 0 : index
    %15 = vector.load %arg6[%c0_12, %c0_13] : memref<128x8xf32, #tpu.memory_space<vmem>>, vector<128x8xf32>
    %cst_14 = arith.constant dense<0.000000e+00> : vector<64x8xf32>
    %16 = tpu.matmul %14, %15, %cst_14 {dimension_numbers = #tpu.dot_dimension_numbers<[1], [0], [0], [1], [0, 0, 1, 1], [], []>} : vector<64x128xf32>, vector<128x8xf32>, vector<64x8xf32> -> vector<64x8xf32>
    %c0_15 = arith.constant 0 : index
    %c0_16 = arith.constant 0 : index
    %17 = vector.load %arg7[%c0_15, %c0_16] : memref<1x8xf32, #tpu.memory_space<vmem>>, vector<1x8xf32>
    %18 = vector.broadcast %17 : vector<1x8xf32> to vector<64x8xf32>
    %19 = arith.addf %16, %18 : vector<64x8xf32>
    %c0_17 = arith.constant 0 : index
    %c0_18 = arith.constant 0 : index
    %20 = vector.load %arg8[%c0_17, %c0_18] : memref<64x8xf32, #tpu.memory_space<vmem>>, vector<64x8xf32>
    tpu.vector_store %arg8[%c0_17, %c0_18], %19 {strides = array<i32>} : memref<64x8xf32, #tpu.memory_space<vmem>>, vector<64x8xf32>,
    return
  }
  func.func @transform_0(%arg0: i32) -> (i32, i32) {
    %c0_i32 = arith.constant 0 : i32
    %c0_i32_0 = arith.constant 0 : i32
    return %arg0, %c0_i32 : i32, i32
  }
  func.func @transform_1(%arg0: i32) -> (i32, i32) {
    %c0_i32 = arith.constant 0 : i32
    %c0_i32_0 = arith.constant 0 : i32
    %c0_i32_1 = arith.constant 0 : i32
    return %c0_i32, %c0_i32_0 : i32, i32
  }
  func.func @transform_2(%arg0: i32) -> (i32, i32) {
    %c0_i32 = arith.constant 0 : i32
    %c0_i32_0 = arith.constant 0 : i32
    %c0_i32_1 = arith.constant 0 : i32
    return %c0_i32, %c0_i32_0 : i32, i32
  }
  func.func @transform_3(%arg0: i32) -> (i32, i32) {
    %c0_i32 = arith.constant 0 : i32
    %c0_i32_0 = arith.constant 0 : i32
    %c0_i32_1 = arith.constant 0 : i32
    return %c0_i32, %c0_i32_0 : i32, i32
  }
  func.func @transform_4(%arg0: i32) -> (i32, i32) {
    %c0_i32 = arith.constant 0 : i32
    %c0_i32_0 = arith.constant 0 : i32
    %c0_i32_1 = arith.constant 0 : i32
    return %c0_i32, %c0_i32_0 : i32, i32
  }
  func.func @transform_5(%arg0: i32) -> (i32, i32) {
    %c0_i32 = arith.constant 0 : i32
    %c0_i32_0 = arith.constant 0 : i32
    %c0_i32_1 = arith.constant 0 : i32
    return %c0_i32, %c0_i32_0 : i32, i32
  }
  func.func @transform_6(%arg0: i32) -> (i32, i32) {
    %c0_i32 = arith.constant 0 : i32
    %c0_i32_0 = arith.constant 0 : i32
    %c0_i32_1 = arith.constant 0 : i32
    return %c0_i32, %c0_i32_0 : i32, i32
  }
  func.func @transform_7(%arg0: i32) -> (i32, i32) {
    %c0_i32 = arith.constant 0 : i32
    %c0_i32_0 = arith.constant 0 : i32
    return %arg0, %c0_i32 : i32, i32
  }
}

</mosaic_0001>

<llo_original>
// kernel: tpu_custom_call.1
$region0: #{tpu_custom_call.1}
  #allocation0 [shape = 'u32[]', space=smem, size = 0x4, offset = 0x4, fixed_abs, tag = 'smem constant byte address 0x4 - core index']
  #allocation1 [shape = 'u32[72,128]{1,0:T(1,128)}', space=vmem, size = 0x9000, scoped, tag = 'internal scratch']
  %s0 = inlined_call_operand.vmem [shape: f32[64,32], index: 0, kind: input, shape index: {}]
  %s1 = inlined_call_operand.vmem [shape: f32[32,128], index: 1, kind: input, shape index: {}]
  %s2 = inlined_call_operand.vmem [shape: f32[1,128], index: 2, kind: input, shape index: {}]
  %s3 = inlined_call_operand.vmem [shape: f32[128,128], index: 3, kind: input, shape index: {}]
  %s4 = inlined_call_operand.vmem [shape: f32[1,128], index: 4, kind: input, shape index: {}]
  %s5 = inlined_call_operand.vmem [shape: f32[128,8], index: 5, kind: input, shape index: {}]
  %s6 = inlined_call_operand.vmem [shape: f32[1,8], index: 6, kind: input, shape index: {}]
  %s7 = inlined_call_operand.vmem [shape: f32[64,8], index: 7, kind: output, shape index: {}]
  %s8 = sld [smem:[#allocation0]]
  $region38: #{tpu_custom_call.1} parent=0
    _
  %s10 = ssub.s32 1, %s8
  %s11 = scalar_select 0, %s10, %s8
  // Predicated region
  $region2: #{tpu_custom_call.1} parent=0 // pred_check
    _
  $region3: #{tpu_custom_call.1} parent=0 // pred_check_branch
    %13 = sbr.rel (0) target = $region5
  $region4: #{tpu_custom_call.1} parent=0 // pred_region
    _
  $region5: #{tpu_custom_call.1} parent=0 // pred_fallthru
    _
  // Predicated region
  $region6: #{tpu_custom_call.1} parent=0 // pred_check
    _
  $region7: #{tpu_custom_call.1} parent=0 // pred_check_branch
    %15 = sbr.rel (0) target = $region9
  $region8: #{tpu_custom_call.1} parent=0 // pred_region
    _
  $region9: #{tpu_custom_call.1} parent=0 // pred_fallthru
    _
  // Predicated region
  $region10: #{tpu_custom_call.1} parent=0 // pred_check
    _
  $region11: #{tpu_custom_call.1} parent=0 // pred_check_branch
    %17 = sbr.rel (0) target = $region13
  $region12: #{tpu_custom_call.1} parent=0 // pred_region
    _
  $region13: #{tpu_custom_call.1} parent=0 // pred_fallthru
    _
  // Predicated region
  $region14: #{tpu_custom_call.1} parent=0 // pred_check
    _
  $region15: #{tpu_custom_call.1} parent=0 // pred_check_branch
    %19 = sbr.rel (0) target = $region17
  $region16: #{tpu_custom_call.1} parent=0 // pred_region
    _
  $region17: #{tpu_custom_call.1} parent=0 // pred_fallthru
    _
  // Predicated region
  $region18: #{tpu_custom_call.1} parent=0 // pred_check
    _
  $region19: #{tpu_custom_call.1} parent=0 // pred_check_branch
    %21 = sbr.rel (0) target = $region21
  $region20: #{tpu_custom_call.1} parent=0 // pred_region
    _
  $region21: #{tpu_custom_call.1} parent=0 // pred_fallthru
    _
  // Predicated region
  $region22: #{tpu_custom_call.1} parent=0 // pred_check
    _
  $region23: #{tpu_custom_call.1} parent=0 // pred_check_branch
    %23 = sbr.rel (0) target = $region25
  $region24: #{tpu_custom_call.1} parent=0 // pred_region
    _
  $region25: #{tpu_custom_call.1} parent=0 // pred_fallthru
    _
  // Predicated region
  $region26: #{tpu_custom_call.1} parent=0 // pred_check
    _
  $region27: #{tpu_custom_call.1} parent=0 // pred_check_branch
    %25 = sbr.rel (0) target = $region29
  $region28: #{tpu_custom_call.1} parent=0 // pred_region
    _
  $region29: #{tpu_custom_call.1} parent=0 // pred_fallthru
    _
  %v26 = vld [vmem:[%s0] sm:$0xff]
  %v27 = vld [vmem:[%s0 + $0x8] sm:$0xff]
  %v28 = vld [vmem:[%s0 + $0x10] sm:$0xff]
  %v29 = vld [vmem:[%s0 + $0x18] sm:$0xff]
  %v30 = vld [vmem:[%s0 + $0x20] sm:$0xff]
  %v31 = vld [vmem:[%s0 + $0x28] sm:$0xff]
  %v32 = vld [vmem:[%s0 + $0x30] sm:$0xff]
  %v33 = vld [vmem:[%s0 + $0x38] sm:$0xff]
  %v34 = vld [vmem:[%s1] sm:$0xff]
  %v35 = vld [vmem:[%s1 + $0x8] sm:$0xff]
  %v36 = vld [vmem:[%s1 + $0x10] sm:$0xff]
  %v37 = vld [vmem:[%s1 + $0x18] sm:$0xff]
  %v38 = vld [vmem:[%s2] sm:$0x1]
  %v40 = vperm.slane %v38, 0
  %vm42 = vcmask 261120
  %v44 = vsel %vm42, %v26, 0
  %v47 = vsel %vm42, %v27, 0
  %v50 = vsel %vm42, %v28, 0
  %v53 = vsel %vm42, %v29, 0
  %v56 = vsel %vm42, %v30, 0
  %v59 = vsel %vm42, %v31, 0
  %v62 = vsel %vm42, %v32, 0
  %v65 = vsel %vm42, %v33, 0
  %67 = vmatpush.msra.mxu0 0.0
  %68 = vmatpush.msra.mxu0 0.0
  %69 = vmatpush.msra.mxu0 0.0
  %70 = vmatpush.msra.mxu0 0.0
  %71 = vmatpush.msra.mxu0 0.0
  %72 = vmatpush.msra.mxu0 0.0
  %73 = vmatpush.msra.mxu0 0.0
  %74 = vmatpush.msra.mxu0 0.0
  %75 = vmatpush.msra.mxu0 0.0
  %76 = vmatpush.msra.mxu0 0.0
  %77 = vmatpush.msra.mxu0 0.0
  %78 = vmatpush.msra.mxu0 0.0
  %79 = vmatpush.msra.mxu0 %v37
  %80 = vmatpush.msra.mxu0 %v36
  %81 = vmatpush.msra.mxu0 %v35
  %82 = vmatpush.msra.mxu0 %v34
  %83 = vmatmul.f32.gmra.mxu0 %v44
  %v84 = vpop.f32.mrf.mxu0
  %v85 = vadd.f32 %v40, %v84
  %86 = vmatmul.f32.gmra.mxu0 %v47
  %v87 = vpop.f32.mrf.mxu0
  %v88 = vadd.f32 %v40, %v87
  %89 = vmatmul.f32.gmra.mxu0 %v50
  %v90 = vpop.f32.mrf.mxu0
  %v91 = vadd.f32 %v40, %v90
  %92 = vmatmul.f32.gmra.mxu0 %v53
  %v93 = vpop.f32.mrf.mxu0
  %v94 = vadd.f32 %v40, %v93
  %95 = vmatmul.f32.gmra.mxu0 %v56
  %v96 = vpop.f32.mrf.mxu0
  %v97 = vadd.f32 %v40, %v96
  %98 = vmatmul.f32.gmra.mxu0 %v59
  %v99 = vpop.f32.mrf.mxu0
  %v100 = vadd.f32 %v40, %v99
  %101 = vmatmul.f32.gmra.mxu0 %v62
  %v102 = vpop.f32.mrf.mxu0
  %v103 = vadd.f32 %v40, %v102
  %104 = vmatmul.f32.gmra.mxu0 %v65
  %v105 = vpop.f32.mrf.mxu0
  %v106 = vadd.f32 %v40, %v105
  %107 = vdwg.mxu0
  %v108 = vmax.f32 %v85, 0.0
  %v109 = vmax.f32 %v88, 0.0
  %v110 = vmax.f32 %v91, 0.0
  %v111 = vmax.f32 %v94, 0.0
  %v112 = vmax.f32 %v97, 0.0
  %v113 = vmax.f32 %v100, 0.0
  %v114 = vmax.f32 %v103, 0.0
  %v115 = vmax.f32 %v106, 0.0
  %v116 = vld [vmem:[%s3] sm:$0xff]
  %v117 = vld [vmem:[%s3 + $0x8] sm:$0xff]
  %v118 = vld [vmem:[%s3 + $0x10] sm:$0xff]
  %v119 = vld [vmem:[%s3 + $0x18] sm:$0xff]
  %v120 = vld [vmem:[%s3 + $0x20] sm:$0xff]
  %v121 = vld [vmem:[%s3 + $0x28] sm:$0xff]
  %v122 = vld [vmem:[%s3 + $0x30] sm:$0xff]
  %v123 = vld [vmem:[%s3 + $0x38] sm:$0xff]
  %v124 = vld [vmem:[%s3 + $0x40] sm:$0xff]
  %v125 = vld [vmem:[%s3 + $0x48] sm:$0xff]
  %v126 = vld [vmem:[%s3 + $0x50] sm:$0xff]
  %v127 = vld [vmem:[%s3 + $0x58] sm:$0xff]
  %v128 = vld [vmem:[%s3 + $0x60] sm:$0xff]
  %v129 = vld [vmem:[%s3 + $0x68] sm:$0xff]
  %v130 = vld [vmem:[%s3 + $0x70] sm:$0xff]
  %v131 = vld [vmem:[%s3 + $0x78] sm:$0xff]
  %v132 = vld [vmem:[%s4] sm:$0x1]
  %v134 = vperm.slane %v132, 0
  %136 = vmatpush.msra.mxu0 %v131
  %137 = vmatpush.msra.mxu0 %v130
  %138 = vmatpush.msra.mxu0 %v129
  %139 = vmatpush.msra.mxu0 %v128
  %140 = vmatpush.msra.mxu0 %v127
  %141 = vmatpush.msra.mxu0 %v126
  %142 = vmatpush.msra.mxu0 %v125
  %143 = vmatpush.msra.mxu0 %v124
  %144 = vmatpush.msra.mxu0 %v123
  %145 = vmatpush.msra.mxu0 %v122
  %146 = vmatpush.msra.mxu0 %v121
  %147 = vmatpush.msra.mxu0 %v120
  %148 = vmatpush.msra.mxu0 %v119
  %149 = vmatpush.msra.mxu0 %v118
  %150 = vmatpush.msra.mxu0 %v117
  %151 = vmatpush.msra.mxu0 %v116
  %152 = vmatmul.f32.gmra.mxu0 %v108
  %v153 = vpop.f32.mrf.mxu0
  %v154 = vadd.f32 %v134, %v153
  %155 = vmatmul.f32.gmra.mxu0 %v109
  %v156 = vpop.f32.mrf.mxu0
  %v157 = vadd.f32 %v134, %v156
  %158 = vmatmul.f32.gmra.mxu0 %v110
  %v159 = vpop.f32.mrf.mxu0
  %v160 = vadd.f32 %v134, %v159
  %161 = vmatmul.f32.gmra.mxu0 %v111
  %v162 = vpop.f32.mrf.mxu0
  %v163 = vadd.f32 %v134, %v162
  %164 = vmatmul.f32.gmra.mxu0 %v112
  %v165 = vpop.f32.mrf.mxu0
  %v166 = vadd.f32 %v134, %v165
  %167 = vmatmul.f32.gmra.mxu0 %v113
  %v168 = vpop.f32.mrf.mxu0
  %v169 = vadd.f32 %v134, %v168
  %170 = vmatmul.f32.gmra.mxu0 %v114
  %v171 = vpop.f32.mrf.mxu0
  %v172 = vadd.f32 %v134, %v171
  %173 = vmatmul.f32.gmra.mxu0 %v115
  %v174 = vpop.f32.mrf.mxu0
  %v175 = vadd.f32 %v134, %v174
  %176 = vdwg.mxu0
  %v177 = vmax.f32 %v154, 0.0
  %v178 = vmax.f32 %v157, 0.0
  %v179 = vmax.f32 %v160, 0.0
  %v180 = vmax.f32 %v163, 0.0
  %v181 = vmax.f32 %v166, 0.0
  %v182 = vmax.f32 %v169, 0.0
  %v183 = vmax.f32 %v172, 0.0
  %v184 = vmax.f32 %v175, 0.0
  %v185 = vld [vmem:[%s5] sm:$0xff]
  %v186 = vld [vmem:[%s5 + $0x8] sm:$0xff]
  %v187 = vld [vmem:[%s5 + $0x10] sm:$0xff]
  %v188 = vld [vmem:[%s5 + $0x18] sm:$0xff]
  %v189 = vld [vmem:[%s5 + $0x20] sm:$0xff]
  %v190 = vld [vmem:[%s5 + $0x28] sm:$0xff]
  %v191 = vld [vmem:[%s5 + $0x30] sm:$0xff]
  %v192 = vld [vmem:[%s5 + $0x38] sm:$0xff]
  %v193 = vld [vmem:[%s5 + $0x40] sm:$0xff]
  %v194 = vld [vmem:[%s5 + $0x48] sm:$0xff]
  %v195 = vld [vmem:[%s5 + $0x50] sm:$0xff]
  %v196 = vld [vmem:[%s5 + $0x58] sm:$0xff]
  %v197 = vld [vmem:[%s5 + $0x60] sm:$0xff]
  %v198 = vld [vmem:[%s5 + $0x68] sm:$0xff]
  %v199 = vld [vmem:[%s5 + $0x70] sm:$0xff]
  %v200 = vld [vmem:[%s5 + $0x78] sm:$0xff]
  %v201 = vld [vmem:[%s6] sm:$0x1]
  %v203 = vperm.slane %v201, 0
  %205 = vmatpush.msra.mxu0 %v200
  %206 = vmatpush.msra.mxu0 %v199
  %207 = vmatpush.msra.mxu0 %v198
  %208 = vmatpush.msra.mxu0 %v197
  %209 = vmatpush.msra.mxu0 %v196
  %210 = vmatpush.msra.mxu0 %v195
  %211 = vmatpush.msra.mxu0 %v194
  %212 = vmatpush.msra.mxu0 %v193
  %213 = vmatpush.msra.mxu0 %v192
  %214 = vmatpush.msra.mxu0 %v191
  %215 = vmatpush.msra.mxu0 %v190
  %216 = vmatpush.msra.mxu0 %v189
  %217 = vmatpush.msra.mxu0 %v188
  %218 = vmatpush.msra.mxu0 %v187
  %219 = vmatpush.msra.mxu0 %v186
  %220 = vmatpush.msra.mxu0 %v185
  %221 = vmatmul.f32.gmra.mxu0 %v177
  %v222 = vpop.f32.mrf.mxu0
  %v223 = vadd.f32 %v203, %v222
  %224 = vmatmul.f32.gmra.mxu0 %v178
  %v225 = vpop.f32.mrf.mxu0
  %v226 = vadd.f32 %v203, %v225
  %227 = vmatmul.f32.gmra.mxu0 %v179
  %v228 = vpop.f32.mrf.mxu0
  %v229 = vadd.f32 %v203, %v228
  %230 = vmatmul.f32.gmra.mxu0 %v180
  %v231 = vpop.f32.mrf.mxu0
  %v232 = vadd.f32 %v203, %v231
  %233 = vmatmul.f32.gmra.mxu0 %v181
  %v234 = vpop.f32.mrf.mxu0
  %v235 = vadd.f32 %v203, %v234
  %236 = vmatmul.f32.gmra.mxu0 %v182
  %v237 = vpop.f32.mrf.mxu0
  %v238 = vadd.f32 %v203, %v237
  %239 = vmatmul.f32.gmra.mxu0 %v183
  %v240 = vpop.f32.mrf.mxu0
  %v241 = vadd.f32 %v203, %v240
  %242 = vmatmul.f32.gmra.mxu0 %v184
  %v243 = vpop.f32.mrf.mxu0
  %v244 = vadd.f32 %v203, %v243
  %245 = vdwg.mxu0
  %vm246 = vcmask 64512
  %247 = vst.msk [vmem:[%s7] sm:$0xff] %vm246, %v223
  %248 = vst.msk [vmem:[%s7 + $0x8] sm:$0xff] %vm246, %v226
  %249 = vst.msk [vmem:[%s7 + $0x10] sm:$0xff] %vm246, %v229
  %250 = vst.msk [vmem:[%s7 + $0x18] sm:$0xff] %vm246, %v232
  %251 = vst.msk [vmem:[%s7 + $0x20] sm:$0xff] %vm246, %v235
  %252 = vst.msk [vmem:[%s7 + $0x28] sm:$0xff] %vm246, %v238
  %253 = vst.msk [vmem:[%s7 + $0x30] sm:$0xff] %vm246, %v241
  %254 = vst.msk [vmem:[%s7 + $0x38] sm:$0xff] %vm246, %v244
  // Predicated region
  $region30: #{tpu_custom_call.1} parent=0 // pred_check
    _
  $region31: #{tpu_custom_call.1} parent=0 // pred_check_branch
    %256 = sbr.rel (0) target = $region33
  $region32: #{tpu_custom_call.1} parent=0 // pred_region
    _
  $region33: #{tpu_custom_call.1} parent=0 // pred_fallthru
    _
  // Predicated region
  $region34: #{tpu_custom_call.1} parent=0 // pred_check
    _
  $region35: #{tpu_custom_call.1} parent=0 // pred_check_branch
    %258 = sbr.rel (0) target = $region37
  $region36: #{tpu_custom_call.1} parent=0 // pred_region
    _
  $region37: #{tpu_custom_call.1} parent=0 // pred_fallthru
    _

</llo_original>
